<compile_context>
chip_gen: v6e
topology: v6e:2x2x1
jax: 0.10.0
libtpu: 0.0.40
codegen_flags: <defaults>
</compile_context>

<pallas_src>
import jax
import jax.numpy as jnp
from jax.experimental import pallas as pl
from jax.experimental.pallas import tpu as pltpu


def generate_filter(start, end, size):
    return [[0.0 if i + j > end or i + j <= start else 1.0 for j in range(size)]
            for i in range(size)]


# Below this total-bytes threshold the pallas_call launch + pipeline-step
# overhead dominates the HBM traffic of a pure load-mul-store; let XLA fuse it.
_FAST_PATH_MAX_BYTES = 4 * 1024 * 1024


def _filter_mul_kernel(x_ref, filt_ref, o_ref):
    # x_ref: (tm, L) row tile; filt_ref: (8, L) resident, sublane-aligned.
    # Pure lane-dense load -> broadcast multiply -> store (HBM roofline).
    o_ref[...] = x_ref[...] * filt_ref[0:1, :]


def _round_up(a, m):
    return ((a + m - 1) // m) * m


def _pick_row_tile(R, L, itemsize):
    """Choose (tm, num_grid_steps) for the (R, L) streaming multiply."""
    if R <= 8:
        return R, 1  # full extent; satisfies the (8,128)-or-full-dim rule

    # Generation-aware block budget: keep the double-buffered in+out working
    # set (~4 x block_bytes) well under the scoped-VMEM default of this chip.
    try:
        vmem_bytes = pltpu.get_tpu_info().vmem_capacity_bytes
    except Exception:  # interpret mode / older builds: be conservative (v7x)
        vmem_bytes = 64 * 1024 * 1024
    block_budget = max(1 << 20, vmem_bytes // 32)  # 4 MiB @128 MiB, 2 MiB @64 MiB
    row_bytes = max(1, L * itemsize)
    cap = max(8, (block_budget // row_bytes) // 8 * 8)

    num_blocks = pl.cdiv(R, cap)
    # Megacore (v7x: 2 TCs): guarantee >=2 blocks once there is enough work,
    # and keep the block count even so both cores get equal shares.
    if R >= 64:
        num_blocks = max(num_blocks, 2)
    if num_blocks > 1 and num_blocks % 2 == 1:
        num_blocks += 1

    tm = _round_up(pl.cdiv(R, num_blocks), 8)
    tm = min(tm, _round_up(R, 8))
    grid = pl.cdiv(R, tm)
    return tm, grid


def filter_forward(x, base, learnable, *, use_learnable=True, norm=False,
                   ft_num=None, use_pallas=None):
    """x: (B, C, H, W); base/learnable: (H, W). Returns (B, C, H, W).

    use_pallas: None = auto (fast jnp path for tiny inputs), True = force the
    Pallas kernel, False = force the plain-XLA path.
    """
    B, C, H, W = x.shape
    assert base.shape == (H, W)
    L = H * W
    R = B * C

    # ---- filter construction (tiny param-only math, done once, outside the
    # per-row-tile loop; 2*sigmoid(v)-1 == tanh(v/2)) ----
    if use_learnable:
        assert learnable.shape == (H, W)
        filt = base + jnp.tanh(0.5 * learnable)
    else:
        filt = base
    if norm:
        filt = filt / jnp.asarray(ft_num, dtype=filt.dtype)
    filt = filt.astype(x.dtype)

    # ---- lane-dense layout: fuse (B, C) into rows, (H, W) into lanes ----
    x2d = x.reshape(R, L)
    filt_row = filt.reshape(1, L)

    total_bytes = R * L * x.dtype.itemsize
    if use_pallas is None:
        use_pallas = total_bytes > _FAST_PATH_MAX_BYTES

    if not use_pallas:
        # Tiny-input fast path: a single fused XLA multiply beats any
        # pallas_call launch at this size.
        y2d = x2d * filt_row
        return y2d.reshape(B, C, H, W)

    # 8-sublane-aligned resident filter block (8 * L * itemsize, a few KiB).
    filt_blk = jnp.broadcast_to(filt_row, (8, L))

    tm, num_steps = _pick_row_tile(R, L, x.dtype.itemsize)
    grid = (num_steps,)

    y2d = pl.pallas_call(
        _filter_mul_kernel,
        out_shape=jax.ShapeDtypeStruct((R, L), x.dtype),
        grid_spec=pltpu.PrefetchScalarGridSpec(
            num_scalar_prefetch=0,
            grid=grid,
            in_specs=[
                pl.BlockSpec((tm, L), lambda i: (i, 0)),   # x row tile
                pl.BlockSpec((8, L), lambda i: (0, 0)),    # filter (resident)
            ],
            out_specs=pl.BlockSpec((tm, L), lambda i: (i, 0)),
        ),
        compiler_params=pltpu.CompilerParams(
            dimension_semantics=("parallel",)),
    )(x2d, filt_blk)

    return y2d.reshape(B, C, H, W)


if __name__ == "__main__":
    # Module config (synthetic, deterministic init)
    size = 16
    band_start, band_end = 0, size // 2
    use_learnable = True

    # Parameters
    base = jnp.array(generate_filter(band_start, band_end, size),
                     dtype=jnp.float32)
    key = jax.random.PRNGKey(0)
    k_learn, k_x = jax.random.split(key)
    learnable = 0.1 * jax.random.normal(k_learn, (size, size),
                                        dtype=jnp.float32)
    ft_num = jnp.sum(base)  # only used when norm=True

    # Input (B, C, size, size) — NCHW like the PyTorch module
    B, C = 2, 4
    x = jax.random.normal(k_x, (B, C, size, size), dtype=jnp.float32)

    # Reference in plain JAX (exactly as the PyTorch module computes it)
    filt_ref = base + (2.0 * jax.nn.sigmoid(learnable) - 1.0)
    y_ref = x * filt_ref
    y_n_ref = x * filt_ref / ft_num

    # --- Pallas kernel path (forced, so the kernel is actually exercised) ---
    y = filter_forward(x, base, learnable, use_learnable=use_learnable,
                       norm=False, use_pallas=True)
    y = jax.block_until_ready(y)
    y_n = filter_forward(x, base, learnable, use_learnable=use_learnable,
                         norm=True, ft_num=ft_num, use_pallas=True)
    y_n = jax.block_until_ready(y_n)

    assert jnp.allclose(y, y_ref, atol=1e-6), "mismatch vs reference (norm=False)"
    assert jnp.allclose(y_n, y_n_ref, atol=1e-6), "mismatch vs reference (norm=True)"

    # --- Auto path (tiny input -> fused-XLA fast path), same semantics ---
    y_auto = filter_forward(x, base, learnable, use_learnable=use_learnable,
                            norm=False)
    y_auto = jax.block_until_ready(y_auto)
    assert jnp.allclose(y_auto, y_ref, atol=1e-6), "mismatch vs reference (fast path)"

    print("KERNEL_OK")
</pallas_src>

<mosaic_0001>
module attributes {stable_mosaic.version = 11 : i64} {
  func.func @_filter_mul_kernel(%arg0: i32, %arg1: memref<8x256xf32, #tpu.memory_space<vmem>>, %arg2: memref<8x256xf32, #tpu.memory_space<vmem>>, %arg3: memref<8x256xf32, #tpu.memory_space<vmem>>) attributes {dimension_semantics = [#tpu.dimension_semantics<parallel>], iteration_bounds = array<i64: 1>, scalar_prefetch = 0 : i64, scratch_operands = 0 : i64, tpu.core_type = #tpu.core_type<tc>, window_params = [{transform_indices = @transform_0, window_bounds = array<i64: 8, 256>}, {pipeline_mode = #tpu.pipeline_mode<synchronous>, transform_indices = @transform_1, window_bounds = array<i64: 8, 256>}, {transform_indices = @transform_2, window_bounds = array<i64: 8, 256>}]} {
    %c0 = arith.constant 0 : index
    %c0_0 = arith.constant 0 : index
    %0 = vector.load %arg1[%c0, %c0_0] : memref<8x256xf32, #tpu.memory_space<vmem>>, vector<8x256xf32>
    %c0_1 = arith.constant 0 : index
    %c0_2 = arith.constant 0 : index
    %1 = vector.load %arg2[%c0_1, %c0_2] : memref<8x256xf32, #tpu.memory_space<vmem>>, vector<1x256xf32>
    %2 = vector.broadcast %1 : vector<1x256xf32> to vector<8x256xf32>
    %3 = arith.mulf %0, %2 : vector<8x256xf32>
    %c0_3 = arith.constant 0 : index
    %c0_4 = arith.constant 0 : index
    %4 = vector.load %arg3[%c0_3, %c0_4] : memref<8x256xf32, #tpu.memory_space<vmem>>, vector<8x256xf32>
    tpu.vector_store %arg3[%c0_3, %c0_4], %3 {strides = array<i32>} : memref<8x256xf32, #tpu.memory_space<vmem>>, vector<8x256xf32>,
    return
  }
  func.func @transform_0(%arg0: i32) -> (i32, i32) {
    %c0_i32 = arith.constant 0 : i32
    %c0_i32_0 = arith.constant 0 : i32
    return %arg0, %c0_i32 : i32, i32
  }
  func.func @transform_1(%arg0: i32) -> (i32, i32) {
    %c0_i32 = arith.constant 0 : i32
    %c0_i32_0 = arith.constant 0 : i32
    %c0_i32_1 = arith.constant 0 : i32
    return %c0_i32, %c0_i32_0 : i32, i32
  }
  func.func @transform_2(%arg0: i32) -> (i32, i32) {
    %c0_i32 = arith.constant 0 : i32
    %c0_i32_0 = arith.constant 0 : i32
    return %arg0, %c0_i32 : i32, i32
  }
}

</mosaic_0001>

<llo_original>
// kernel: tpu_custom_call.1
$region0: #{tpu_custom_call.1}
  #allocation0 [shape = 'u32[]', space=smem, size = 0x4, offset = 0x4, fixed_abs, tag = 'smem constant byte address 0x4 - core index']
  #allocation1 [shape = 'u32[144,128]{1,0:T(1,128)}', space=vmem, size = 0x12000, scoped, tag = 'internal scratch']
  %s0 = inlined_call_operand.hbm [shape: f32[8,256], index: 0, kind: input, shape index: {}]
  %s1 = inlined_call_operand.hbm [shape: f32[8,256], index: 1, kind: input, shape index: {}]
  %s2 = inlined_call_operand.hbm [shape: f32[8,256], index: 2, kind: output, shape index: {}]
  %s3 = sld [smem:[#allocation0]]
  $region26: #{tpu_custom_call.1} parent=0
    _
  %s5 = ssub.s32 1, %s3
  %s6 = scalar_select 0, %s5, %s3
  $region1: #{tpu_custom_call.1} parent=0
    #allocation2 [shape = 'u8[8192]{0}', space=vmem, size = 0x2000, scoped, tag = 'input window, operand 0, single buffered']
    #allocation3 [shape = 's32[1]{0}', space=sflag, size = 0x4, scoped, tag = 'scoped memory for tpu_custom_call.1']
    #allocation4 [shape = 's32[1]{0}', space=sflag, size = 0x4, scoped, tag = 'scoped memory for tpu_custom_call.1']
    #allocation5 [shape = 'u8[8192]{0}', space=vmem, size = 0x2000, scoped, tag = 'input window, operand 1, single buffered']
    #allocation6 [shape = 's32[1]{0}', space=sflag, size = 0x4, scoped, tag = 'scoped memory for tpu_custom_call.1']
    #allocation7 [shape = 'u8[8192]{0}', space=vmem, size = 0x2000, scoped, tag = 'output window, operand 0, single buffered']
    %7 = vsyncpa [#allocation3], 0
    %8 = vsyncpa [#allocation6], 0
    %9 = vsyncpa [#allocation4], 0
    // Predicated region
    $region2: #{tpu_custom_call.1} parent=1 // pred_check
      _
    $region3: #{tpu_custom_call.1} parent=1 // pred_check_branch
      %11 = sbr.rel (0) target = $region5
    $region4: #{tpu_custom_call.1} parent=1 // pred_region
      %s13 = ssub.s32 256, 256
      %14 = vsyncadd [#allocation3], %s13
      %s16 = sshll.u32 [#allocation2], 4
      %s17 = int_to_ptr.vmem [resolvable:$true] %s16
      %19 = dma.hbm_to_vmem [thread:$0]  %s0, 256, %s17, [#allocation3]
    $region5: #{tpu_custom_call.1} parent=1 // pred_fallthru
      _
    // Predicated region
    $region6: #{tpu_custom_call.1} parent=1 // pred_check
      _
    $region7: #{tpu_custom_call.1} parent=1 // pred_check_branch
      %21 = sbr.rel (0) target = $region9
    $region8: #{tpu_custom_call.1} parent=1 // pred_region
      %s23 = ssub.s32 256, 256
      %24 = vsyncadd [#allocation6], %s23
      %s26 = sshll.u32 [#allocation5], 4
      %s27 = int_to_ptr.vmem [resolvable:$true] %s26
      %29 = dma.hbm_to_vmem [thread:$0]  %s1, 256, %s27, [#allocation6]
    $region9: #{tpu_custom_call.1} parent=1 // pred_fallthru
      _
    // Predicated region
    $region10: #{tpu_custom_call.1} parent=1 // pred_check
      _
    $region11: #{tpu_custom_call.1} parent=1 // pred_check_branch
      %31 = sbr.rel (0) target = $region13
    $region12: #{tpu_custom_call.1} parent=1 // pred_region
      %32 = dma.done [#allocation3], 256
    $region13: #{tpu_custom_call.1} parent=1 // pred_fallthru
      _
    // Predicated region
    $region14: #{tpu_custom_call.1} parent=1 // pred_check
      _
    $region15: #{tpu_custom_call.1} parent=1 // pred_check_branch
      %34 = sbr.rel (0) target = $region17
    $region16: #{tpu_custom_call.1} parent=1 // pred_region
      %35 = dma.done [#allocation6], 256
    $region17: #{tpu_custom_call.1} parent=1 // pred_fallthru
      _
    %v36 = vld [vmem:[#allocation2] sm:$0xff]
    %v37 = vld [vmem:[#allocation2 + $0x8] sm:$0xff]
    %v38 = vld [vmem:[#allocation5] ss:$8 sm:$0x3]
    %v40 = vlaneseq
    %v41 = vshrl.u32 %v40, 7
    %v42 = vsub.s32 0, %v41
    %v43 = vrot.slane %v38, %v42
    %v44 = vlaneseq
    %v45 = vshrl.u32 %v44, 7
    %v46 = vsub.s32 1, %v45
    %v47 = vrot.slane %v38, %v46
    %v50 = vmul.f32 %v36, %v43
    %v51 = vmul.f32 %v37, %v47
    %52 = vst [vmem:[#allocation7] sm:$0xff] %v50
    %53 = vst [vmem:[#allocation7 + $0x8] sm:$0xff] %v51
    // Predicated region
    $region18: #{tpu_custom_call.1} parent=1 // pred_check
      _
    $region19: #{tpu_custom_call.1} parent=1 // pred_check_branch
      %55 = sbr.rel (0) target = $region21
    $region20: #{tpu_custom_call.1} parent=1 // pred_region
      %s57 = ssub.s32 256, 256
      %58 = vsyncadd [#allocation4], %s57
      %s60 = sshll.u32 [#allocation7], 4
      %s61 = int_to_ptr.vmem [resolvable:$true] %s60
      %63 = dma.vmem_to_hbm [thread:$0]  %s61, 256, %s2, [#allocation4]
    $region21: #{tpu_custom_call.1} parent=1 // pred_fallthru
      _
    // Predicated region
    $region22: #{tpu_custom_call.1} parent=1 // pred_check
      _
    $region23: #{tpu_custom_call.1} parent=1 // pred_check_branch
      %65 = sbr.rel (0) target = $region25
    $region24: #{tpu_custom_call.1} parent=1 // pred_region
      %66 = dma.done [#allocation4], 256
    $region25: #{tpu_custom_call.1} parent=1 // pred_fallthru
      _
    %67 = vsyncpa [#allocation3], 1
    %68 = vsyncpa [#allocation6], 1
    %69 = vsyncpa [#allocation4], 1

</llo_original>
